<compile_context>
chip_gen: v6e
topology: v6e:2x2x1
jax: 0.10.0
libtpu: 0.0.40
codegen_flags: <defaults>
</compile_context>

<pallas_src>
import functools

import jax
import jax.numpy as jnp
from jax.experimental import pallas as pl
from jax.experimental.pallas import tpu as pltpu


def _round_up(x, m):
    return ((x + m - 1) // m) * m


def _embedding_gather_kernel(ids_ref, table_ref, out_ref, row_sem, *, vocab_size, unroll):
    """Gather TN table rows into the (TN, D) output block of this grid step.

    ids_ref:   SMEM (n_chunk,) int32 -- all token ids of this chunk (scalar prefetch)
    table_ref: (V, D) table; raw HBM ref (general path) or resident VMEM block (fast path)
    out_ref:   VMEM (TN, D) output tile
    row_sem:   shared DMA semaphore array of shape (1,)
    """
    tile_n = out_ref.shape[0]
    base = pl.program_id(0) * tile_n
    sem = row_sem.at[0]

    def issue(j, carry):
        row = ids_ref[base + j]                      # cheap SMEM scalar read
        row = jnp.clip(row, 0, vocab_size - 1)       # avoid DMA OOB faults on bad ids
        pltpu.make_async_copy(
            table_ref.at[pl.ds(row, 1), :],          # (1, D) table row (HBM or VMEM)
            out_ref.at[pl.ds(j, 1), :],              # (1, D) row of the output block
            sem,                                     # every row signals the same sem
        ).start()
        return carry

    # Unrolled issue loop: pipelines SMEM id reads, address math and descriptor pushes
    # across iterations (descriptor issue is scalar/misc-slot bound, not VPU/MXU bound).
    jax.lax.fori_loop(0, tile_n, issue, 0, unroll=unroll)

    # Single aggregate wait: each row DMA increments `sem` by its (1, D) byte count, so
    # waiting on a descriptor whose *dst* is the whole (TN, D) block waits for exactly
    # the sum of all row copies. The wait amount is derived from the dst ref only, so
    # using out_ref for both src and dst keeps the byte counts matched by construction
    # (and never slices the table, which may have V < TN rows).
    pltpu.make_async_copy(out_ref, out_ref, sem).wait()


def _embedding_lookup_chunk(ids, table, *, tile_n, use_vmem_table, unroll):
    """ids: (n_pad,) int32 with n_pad % tile_n == 0  ->  (n_pad, D) gathered rows."""
    (n_pad,) = ids.shape
    V, D = table.shape
    itemsize = jnp.dtype(table.dtype).itemsize
    num_tiles = n_pad // tile_n

    if use_vmem_table:
        # Constant index_map: the table block is DMA'd HBM->VMEM once per core and
        # stays resident across all token tiles; in-kernel row gathers are then cheap
        # local VMEM->VMEM copies (no per-row HBM latency, no repeated HBM reads).
        table_spec = pl.BlockSpec((V, D), lambda i, ids_ref: (0, 0))
        table_traffic = V * D * itemsize
    else:
        # Table stays in HBM; rows are gathered with small HBM->VMEM DMAs.
        table_spec = pl.BlockSpec(memory_space=pl.ANY)
        table_traffic = n_pad * D * itemsize

    kernel = functools.partial(_embedding_gather_kernel, vocab_size=V, unroll=unroll)

    return pl.pallas_call(
        kernel,
        out_shape=jax.ShapeDtypeStruct((n_pad, D), table.dtype),
        grid_spec=pltpu.PrefetchScalarGridSpec(
            num_scalar_prefetch=1,                       # ids -> SMEM
            grid=(num_tiles,),
            in_specs=[table_spec],
            out_specs=pl.BlockSpec((tile_n, D), lambda i, ids_ref: (i, 0)),
            scratch_shapes=[pltpu.SemaphoreType.DMA((1,))],   # ONE shared semaphore
        ),
        compiler_params=pltpu.CompilerParams(
            dimension_semantics=("parallel",),           # v7x: both TCs issue gathers
        ),
        cost_estimate=pl.CostEstimate(
            flops=0,
            transcendentals=0,
            bytes_accessed=int(table_traffic + 2 * n_pad * D * itemsize),
        ),
    )(ids, table)


# Scalar-prefetched ids live in SMEM (1-D arrays pad to next_pow2(4*n) bytes); chunk the
# flat token axis so a huge batch can never blow the SMEM budget or serialize one giant
# upfront prefetch.
_MAX_IDS_PER_CALL = 32768            # <= 128 KiB of SMEM ids per pallas_call
_OUT_TILE_BUDGET_BYTES = 4 << 20     # double-buffered (TN, D) output tile budget (v7x-safe)
_VMEM_TABLE_BUDGET_BYTES = 4 << 20   # fast path if table <= this (x2 for double buffering
                                     # still fits v5e's 16 MiB scoped-VMEM default)


def embedding_forward(tokens, table, *, tile_n=256,
                      vmem_table_budget_bytes=_VMEM_TABLE_BUDGET_BYTES, unroll=8):
    """tokens: (B, S) int ids; table: (V, D) float -> (B, S, D) embeddings."""
    B, S = tokens.shape
    V, D = table.shape
    N = B * S
    itemsize = jnp.dtype(table.dtype).itemsize

    # Tile sizing: sublane-aligned, and keep the double-buffered output tile <= ~4 MiB
    # so the kernel is safe on v7x's smaller VMEM while staying lane-dense (full D).
    max_tile = max(8, (_OUT_TILE_BUDGET_BYTES // (2 * D * itemsize)) // 8 * 8)
    tile_n = int(max(8, min(_round_up(tile_n, 8), max_tile)))

    use_vmem_table = (V * D * itemsize) <= vmem_table_budget_bytes

    ids = tokens.reshape(-1).astype(jnp.int32)
    n_pad = _round_up(max(N, 1), tile_n)
    if n_pad != N:
        # Padding ids are 0 == padding_idx -> they gather the zero row; sliced off below.
        ids = jnp.pad(ids, (0, n_pad - N))

    chunk = max(tile_n, (_MAX_IDS_PER_CALL // tile_n) * tile_n)
    outs = []
    for start in range(0, n_pad, chunk):
        ids_c = ids[start:start + chunk]
        outs.append(_embedding_lookup_chunk(
            ids_c, table, tile_n=tile_n,
            use_vmem_table=use_vmem_table, unroll=unroll))
    out = outs[0] if len(outs) == 1 else jnp.concatenate(outs, axis=0)

    return out[:N].reshape(B, S, D)


def make_embedding_table(key, vocab_size, d_model, padding_idx=0):
    # nn.Embedding default init: N(0, 1); padding_idx row zeroed.
    w = jax.random.normal(key, (vocab_size, d_model), dtype=jnp.float32)
    w = w.at[padding_idx].set(0.0)
    return w


# TODO(synk): the pretrained-weights branch (weights is not None) builds
# nn.Sequential(Linear, Embedding), which as written applies the Linear to raw token
# ids; only the default nn.Embedding path is implemented here.

if __name__ == "__main__":
    key = jax.random.PRNGKey(0)
    k_w, k_t = jax.random.split(key)

    vocab_size = 512
    d_model = 128                 # lane-dense (multiple of 128) output rows
    B, S = 2, 8

    table = make_embedding_table(k_w, vocab_size, d_model, padding_idx=0)
    tokens = jax.random.randint(k_t, (B, S), 0, vocab_size, dtype=jnp.int32)
    tokens = tokens.at[0, 0].set(0)            # exercise the padding_idx row too

    ref = table[tokens]                        # plain JAX gather reference

    # 1) VMEM-resident-table fast path (table is 256 KiB), two token tiles.
    out_fast = jax.block_until_ready(embedding_forward(tokens, table, tile_n=8))
    # 2) General HBM-gather path (forced by a zero VMEM-table budget).
    out_hbm = jax.block_until_ready(
        embedding_forward(tokens, table, tile_n=8, vmem_table_budget_bytes=0))
    # 3) Default tile (exercises a heavily padded tail: 256-row tile, 16 real tokens).
    out_pad = jax.block_until_ready(embedding_forward(tokens, table))

    for out in (out_fast, out_hbm, out_pad):
        assert out.shape == (B, S, d_model)
        assert jnp.array_equal(out, ref), "mismatch vs reference gather"
        assert jnp.all(out[0, 0] == 0.0), "padding_idx row must be zero"

    print("KERNEL_OK")
</pallas_src>

<mosaic_0001>
module attributes {stable_mosaic.version = 11 : i64} {
  func.func @_embedding_gather_kernel(%arg0: i32, %arg1: memref<16xi32, #tpu.memory_space<smem>>, %arg2: memref<512x128xf32, #tpu.memory_space<vmem>>, %arg3: memref<8x128xf32, #tpu.memory_space<vmem>>, %arg4: memref<1x!tpu.dma_semaphore, #tpu.memory_space<semaphore_mem>>) attributes {dimension_semantics = [#tpu.dimension_semantics<parallel>], iteration_bounds = array<i64: 2>, scalar_prefetch = 1 : i64, scratch_operands = 1 : i64, tpu.core_type = #tpu.core_type<tc>, window_params = [{pipeline_mode = #tpu.pipeline_mode<synchronous>, transform_indices = @transform_0, window_bounds = array<i64: 512, 128>}, {transform_indices = @transform_1, window_bounds = array<i64: 8, 128>}]} {
    %c8_i32 = arith.constant 8 : i32
    %0 = arith.muli %arg0, %c8_i32 : i32
    %c0_i32 = arith.constant 0 : i32
    %c0_i32_0 = arith.constant 0 : i32
    %1 = arith.addi %0, %c0_i32_0 : i32
    %2 = arith.index_cast %1 : i32 to index
    %3 = memref.load %arg1[%2] : memref<16xi32, #tpu.memory_space<smem>>
    %c0_i32_1 = arith.constant 0 : i32
    %c511_i32 = arith.constant 511 : i32
    %4 = arith.maxsi %c0_i32_1, %3 : i32
    %5 = arith.minsi %c511_i32, %4 : i32
    %c0_i32_2 = arith.constant 0 : i32
    %6 = tpu.memref_slice %arg2[%5, %c0_i32_2] : memref<512x128xf32, #tpu.memory_space<vmem>> -> memref<1x128xf32, #tpu.memory_space<vmem>>
    %c0_i32_3 = arith.constant 0 : i32
    %7 = tpu.memref_slice %arg3[%c0_i32_0, %c0_i32_3] : memref<8x128xf32, #tpu.memory_space<vmem>> -> memref<1x128xf32, #tpu.memory_space<vmem>>
    %8 = tpu.memref_slice %arg4[%c0_i32] : memref<1x!tpu.dma_semaphore, #tpu.memory_space<semaphore_mem>> -> memref<1x!tpu.dma_semaphore, #tpu.memory_space<semaphore_mem>>
    %9 = tpu.memref_squeeze %8 : memref<1x!tpu.dma_semaphore, #tpu.memory_space<semaphore_mem>> -> memref<!tpu.dma_semaphore, #tpu.memory_space<semaphore_mem>>
    tpu.enqueue_dma source(%6 : memref<1x128xf32, #tpu.memory_space<vmem>>) target(%7 : memref<1x128xf32, #tpu.memory_space<vmem>>) target_semaphore(%9 : memref<!tpu.dma_semaphore, #tpu.memory_space<semaphore_mem>>)
    %c1_i32 = arith.constant 1 : i32
    %10 = arith.addi %0, %c1_i32 : i32
    %11 = arith.index_cast %10 : i32 to index
    %12 = memref.load %arg1[%11] : memref<16xi32, #tpu.memory_space<smem>>
    %c0_i32_4 = arith.constant 0 : i32
    %c511_i32_5 = arith.constant 511 : i32
    %13 = arith.maxsi %c0_i32_4, %12 : i32
    %14 = arith.minsi %c511_i32_5, %13 : i32
    %c0_i32_6 = arith.constant 0 : i32
    %15 = tpu.memref_slice %arg2[%14, %c0_i32_6] : memref<512x128xf32, #tpu.memory_space<vmem>> -> memref<1x128xf32, #tpu.memory_space<vmem>>
    %c0_i32_7 = arith.constant 0 : i32
    %16 = tpu.memref_slice %arg3[%c1_i32, %c0_i32_7] : memref<8x128xf32, #tpu.memory_space<vmem>> -> memref<1x128xf32, #tpu.memory_space<vmem>>
    %17 = tpu.memref_slice %arg4[%c0_i32] : memref<1x!tpu.dma_semaphore, #tpu.memory_space<semaphore_mem>> -> memref<1x!tpu.dma_semaphore, #tpu.memory_space<semaphore_mem>>
    %18 = tpu.memref_squeeze %17 : memref<1x!tpu.dma_semaphore, #tpu.memory_space<semaphore_mem>> -> memref<!tpu.dma_semaphore, #tpu.memory_space<semaphore_mem>>
    tpu.enqueue_dma source(%15 : memref<1x128xf32, #tpu.memory_space<vmem>>) target(%16 : memref<1x128xf32, #tpu.memory_space<vmem>>) target_semaphore(%18 : memref<!tpu.dma_semaphore, #tpu.memory_space<semaphore_mem>>)
    %c2_i32 = arith.constant 2 : i32
    %19 = arith.addi %0, %c2_i32 : i32
    %20 = arith.index_cast %19 : i32 to index
    %21 = memref.load %arg1[%20] : memref<16xi32, #tpu.memory_space<smem>>
    %c0_i32_8 = arith.constant 0 : i32
    %c511_i32_9 = arith.constant 511 : i32
    %22 = arith.maxsi %c0_i32_8, %21 : i32
    %23 = arith.minsi %c511_i32_9, %22 : i32
    %c0_i32_10 = arith.constant 0 : i32
    %24 = tpu.memref_slice %arg2[%23, %c0_i32_10] : memref<512x128xf32, #tpu.memory_space<vmem>> -> memref<1x128xf32, #tpu.memory_space<vmem>>
    %c0_i32_11 = arith.constant 0 : i32
    %25 = tpu.memref_slice %arg3[%c2_i32, %c0_i32_11] : memref<8x128xf32, #tpu.memory_space<vmem>> -> memref<1x128xf32, #tpu.memory_space<vmem>>
    %26 = tpu.memref_slice %arg4[%c0_i32] : memref<1x!tpu.dma_semaphore, #tpu.memory_space<semaphore_mem>> -> memref<1x!tpu.dma_semaphore, #tpu.memory_space<semaphore_mem>>
    %27 = tpu.memref_squeeze %26 : memref<1x!tpu.dma_semaphore, #tpu.memory_space<semaphore_mem>> -> memref<!tpu.dma_semaphore, #tpu.memory_space<semaphore_mem>>
    tpu.enqueue_dma source(%24 : memref<1x128xf32, #tpu.memory_space<vmem>>) target(%25 : memref<1x128xf32, #tpu.memory_space<vmem>>) target_semaphore(%27 : memref<!tpu.dma_semaphore, #tpu.memory_space<semaphore_mem>>)
    %c3_i32 = arith.constant 3 : i32
    %28 = arith.addi %0, %c3_i32 : i32
    %29 = arith.index_cast %28 : i32 to index
    %30 = memref.load %arg1[%29] : memref<16xi32, #tpu.memory_space<smem>>
    %c0_i32_12 = arith.constant 0 : i32
    %c511_i32_13 = arith.constant 511 : i32
    %31 = arith.maxsi %c0_i32_12, %30 : i32
    %32 = arith.minsi %c511_i32_13, %31 : i32
    %c0_i32_14 = arith.constant 0 : i32
    %33 = tpu.memref_slice %arg2[%32, %c0_i32_14] : memref<512x128xf32, #tpu.memory_space<vmem>> -> memref<1x128xf32, #tpu.memory_space<vmem>>
    %c0_i32_15 = arith.constant 0 : i32
    %34 = tpu.memref_slice %arg3[%c3_i32, %c0_i32_15] : memref<8x128xf32, #tpu.memory_space<vmem>> -> memref<1x128xf32, #tpu.memory_space<vmem>>
    %35 = tpu.memref_slice %arg4[%c0_i32] : memref<1x!tpu.dma_semaphore, #tpu.memory_space<semaphore_mem>> -> memref<1x!tpu.dma_semaphore, #tpu.memory_space<semaphore_mem>>
    %36 = tpu.memref_squeeze %35 : memref<1x!tpu.dma_semaphore, #tpu.memory_space<semaphore_mem>> -> memref<!tpu.dma_semaphore, #tpu.memory_space<semaphore_mem>>
    tpu.enqueue_dma source(%33 : memref<1x128xf32, #tpu.memory_space<vmem>>) target(%34 : memref<1x128xf32, #tpu.memory_space<vmem>>) target_semaphore(%36 : memref<!tpu.dma_semaphore, #tpu.memory_space<semaphore_mem>>)
    %c4_i32 = arith.constant 4 : i32
    %37 = arith.addi %0, %c4_i32 : i32
    %38 = arith.index_cast %37 : i32 to index
    %39 = memref.load %arg1[%38] : memref<16xi32, #tpu.memory_space<smem>>
    %c0_i32_16 = arith.constant 0 : i32
    %c511_i32_17 = arith.constant 511 : i32
    %40 = arith.maxsi %c0_i32_16, %39 : i32
    %41 = arith.minsi %c511_i32_17, %40 : i32
    %c0_i32_18 = arith.constant 0 : i32
    %42 = tpu.memref_slice %arg2[%41, %c0_i32_18] : memref<512x128xf32, #tpu.memory_space<vmem>> -> memref<1x128xf32, #tpu.memory_space<vmem>>
    %c0_i32_19 = arith.constant 0 : i32
    %43 = tpu.memref_slice %arg3[%c4_i32, %c0_i32_19] : memref<8x128xf32, #tpu.memory_space<vmem>> -> memref<1x128xf32, #tpu.memory_space<vmem>>
    %44 = tpu.memref_slice %arg4[%c0_i32] : memref<1x!tpu.dma_semaphore, #tpu.memory_space<semaphore_mem>> -> memref<1x!tpu.dma_semaphore, #tpu.memory_space<semaphore_mem>>
    %45 = tpu.memref_squeeze %44 : memref<1x!tpu.dma_semaphore, #tpu.memory_space<semaphore_mem>> -> memref<!tpu.dma_semaphore, #tpu.memory_space<semaphore_mem>>
    tpu.enqueue_dma source(%42 : memref<1x128xf32, #tpu.memory_space<vmem>>) target(%43 : memref<1x128xf32, #tpu.memory_space<vmem>>) target_semaphore(%45 : memref<!tpu.dma_semaphore, #tpu.memory_space<semaphore_mem>>)
    %c5_i32 = arith.constant 5 : i32
    %46 = arith.addi %0, %c5_i32 : i32
    %47 = arith.index_cast %46 : i32 to index
    %48 = memref.load %arg1[%47] : memref<16xi32, #tpu.memory_space<smem>>
    %c0_i32_20 = arith.constant 0 : i32
    %c511_i32_21 = arith.constant 511 : i32
    %49 = arith.maxsi %c0_i32_20, %48 : i32
    %50 = arith.minsi %c511_i32_21, %49 : i32
    %c0_i32_22 = arith.constant 0 : i32
    %51 = tpu.memref_slice %arg2[%50, %c0_i32_22] : memref<512x128xf32, #tpu.memory_space<vmem>> -> memref<1x128xf32, #tpu.memory_space<vmem>>
    %c0_i32_23 = arith.constant 0 : i32
    %52 = tpu.memref_slice %arg3[%c5_i32, %c0_i32_23] : memref<8x128xf32, #tpu.memory_space<vmem>> -> memref<1x128xf32, #tpu.memory_space<vmem>>
    %53 = tpu.memref_slice %arg4[%c0_i32] : memref<1x!tpu.dma_semaphore, #tpu.memory_space<semaphore_mem>> -> memref<1x!tpu.dma_semaphore, #tpu.memory_space<semaphore_mem>>
    %54 = tpu.memref_squeeze %53 : memref<1x!tpu.dma_semaphore, #tpu.memory_space<semaphore_mem>> -> memref<!tpu.dma_semaphore, #tpu.memory_space<semaphore_mem>>
    tpu.enqueue_dma source(%51 : memref<1x128xf32, #tpu.memory_space<vmem>>) target(%52 : memref<1x128xf32, #tpu.memory_space<vmem>>) target_semaphore(%54 : memref<!tpu.dma_semaphore, #tpu.memory_space<semaphore_mem>>)
    %c6_i32 = arith.constant 6 : i32
    %55 = arith.addi %0, %c6_i32 : i32
    %56 = arith.index_cast %55 : i32 to index
    %57 = memref.load %arg1[%56] : memref<16xi32, #tpu.memory_space<smem>>
    %c0_i32_24 = arith.constant 0 : i32
    %c511_i32_25 = arith.constant 511 : i32
    %58 = arith.maxsi %c0_i32_24, %57 : i32
    %59 = arith.minsi %c511_i32_25, %58 : i32
    %c0_i32_26 = arith.constant 0 : i32
    %60 = tpu.memref_slice %arg2[%59, %c0_i32_26] : memref<512x128xf32, #tpu.memory_space<vmem>> -> memref<1x128xf32, #tpu.memory_space<vmem>>
    %c0_i32_27 = arith.constant 0 : i32
    %61 = tpu.memref_slice %arg3[%c6_i32, %c0_i32_27] : memref<8x128xf32, #tpu.memory_space<vmem>> -> memref<1x128xf32, #tpu.memory_space<vmem>>
    %62 = tpu.memref_slice %arg4[%c0_i32] : memref<1x!tpu.dma_semaphore, #tpu.memory_space<semaphore_mem>> -> memref<1x!tpu.dma_semaphore, #tpu.memory_space<semaphore_mem>>
    %63 = tpu.memref_squeeze %62 : memref<1x!tpu.dma_semaphore, #tpu.memory_space<semaphore_mem>> -> memref<!tpu.dma_semaphore, #tpu.memory_space<semaphore_mem>>
    tpu.enqueue_dma source(%60 : memref<1x128xf32, #tpu.memory_space<vmem>>) target(%61 : memref<1x128xf32, #tpu.memory_space<vmem>>) target_semaphore(%63 : memref<!tpu.dma_semaphore, #tpu.memory_space<semaphore_mem>>)
    %c7_i32 = arith.constant 7 : i32
    %64 = arith.addi %0, %c7_i32 : i32
    %65 = arith.index_cast %64 : i32 to index
    %66 = memref.load %arg1[%65] : memref<16xi32, #tpu.memory_space<smem>>
    %c0_i32_28 = arith.constant 0 : i32
    %c511_i32_29 = arith.constant 511 : i32
    %67 = arith.maxsi %c0_i32_28, %66 : i32
    %68 = arith.minsi %c511_i32_29, %67 : i32
    %c0_i32_30 = arith.constant 0 : i32
    %69 = tpu.memref_slice %arg2[%68, %c0_i32_30] : memref<512x128xf32, #tpu.memory_space<vmem>> -> memref<1x128xf32, #tpu.memory_space<vmem>>
    %c0_i32_31 = arith.constant 0 : i32
    %70 = tpu.memref_slice %arg3[%c7_i32, %c0_i32_31] : memref<8x128xf32, #tpu.memory_space<vmem>> -> memref<1x128xf32, #tpu.memory_space<vmem>>
    %71 = tpu.memref_slice %arg4[%c0_i32] : memref<1x!tpu.dma_semaphore, #tpu.memory_space<semaphore_mem>> -> memref<1x!tpu.dma_semaphore, #tpu.memory_space<semaphore_mem>>
    %72 = tpu.memref_squeeze %71 : memref<1x!tpu.dma_semaphore, #tpu.memory_space<semaphore_mem>> -> memref<!tpu.dma_semaphore, #tpu.memory_space<semaphore_mem>>
    tpu.enqueue_dma source(%69 : memref<1x128xf32, #tpu.memory_space<vmem>>) target(%70 : memref<1x128xf32, #tpu.memory_space<vmem>>) target_semaphore(%72 : memref<!tpu.dma_semaphore, #tpu.memory_space<semaphore_mem>>)
    %c8_i32_32 = arith.constant 8 : i32
    %c0_i32_33 = arith.constant 0 : i32
    %73 = tpu.memref_slice %arg4[%c0_i32_33] : memref<1x!tpu.dma_semaphore, #tpu.memory_space<semaphore_mem>> -> memref<1x!tpu.dma_semaphore, #tpu.memory_space<semaphore_mem>>
    %74 = tpu.memref_squeeze %73 : memref<1x!tpu.dma_semaphore, #tpu.memory_space<semaphore_mem>> -> memref<!tpu.dma_semaphore, #tpu.memory_space<semaphore_mem>>
    tpu.wait_dma2 semaphore(%74 : memref<!tpu.dma_semaphore, #tpu.memory_space<semaphore_mem>>) src(%arg3 : memref<8x128xf32, #tpu.memory_space<vmem>>) dst(%arg3 : memref<8x128xf32, #tpu.memory_space<vmem>>)
    return
  }
  func.func @transform_0(%arg0: i32, %arg1: memref<16xi32, #tpu.memory_space<smem>>) -> (i32, i32) {
    %c0_i32 = arith.constant 0 : i32
    %c0_i32_0 = arith.constant 0 : i32
    %c0_i32_1 = arith.constant 0 : i32
    return %c0_i32, %c0_i32_0 : i32, i32
  }
  func.func @transform_1(%arg0: i32, %arg1: memref<16xi32, #tpu.memory_space<smem>>) -> (i32, i32) {
    %c0_i32 = arith.constant 0 : i32
    %c0_i32_0 = arith.constant 0 : i32
    return %arg0, %c0_i32 : i32, i32
  }
}

</mosaic_0001>

<llo_original>
// kernel: tpu_custom_call.1
$region0: #{tpu_custom_call.1}
  #allocation0 [shape = 'u32[]', space=smem, size = 0x4, offset = 0x4, fixed_abs, tag = 'smem constant byte address 0x4 - core index']
  #allocation1 [shape = 'u32[144,128]{1,0:T(1,128)}', space=vmem, size = 0x12000, scoped, tag = 'internal scratch']
  #allocation2 [shape = 's32[1]{0}', space=sflag, size = 0x4, scoped, tag = 'scratch operand']
  #allocation3 [shape = 's32[1]{0}', space=sflag, size = 0x4, scoped, tag = 'scoped memory for tpu_custom_call.1']
  #allocation4 [shape = 'u8[512]{0}', space=smem, size = 0x200, scoped, tag = 'prefetched SMEM operand 0']
  #allocation9 [shape = 's32[]', space=sflag, size = 0x4, offset = 0, fixed_abs, tag = 'sflag constant byte address 0x0 - dummy sync flag']
  #allocation10 [shape = 's32[]', space=sflag, size = 0x4, offset = 0, fixed_abs, tag = 'sflag constant byte address 0x0 - dummy sync flag']
  #allocation11 [shape = 's32[]', space=sflag, size = 0x4, offset = 0, fixed_abs, tag = 'sflag constant byte address 0x0 - dummy sync flag']
  #allocation12 [shape = 's32[]', space=sflag, size = 0x4, offset = 0, fixed_abs, tag = 'sflag constant byte address 0x0 - dummy sync flag']
  #allocation13 [shape = 's32[]', space=sflag, size = 0x4, offset = 0, fixed_abs, tag = 'sflag constant byte address 0x0 - dummy sync flag']
  #allocation14 [shape = 's32[]', space=sflag, size = 0x4, offset = 0, fixed_abs, tag = 'sflag constant byte address 0x0 - dummy sync flag']
  #allocation15 [shape = 's32[]', space=sflag, size = 0x4, offset = 0, fixed_abs, tag = 'sflag constant byte address 0x0 - dummy sync flag']
  #allocation16 [shape = 's32[]', space=sflag, size = 0x4, offset = 0, fixed_abs, tag = 'sflag constant byte address 0x0 - dummy sync flag']
  %s0 = inlined_call_operand.hbm [shape: s32[16], index: 0, kind: input, shape index: {}]
  %s1 = inlined_call_operand.hbm [shape: f32[512,128], index: 1, kind: input, shape index: {}]
  %s2 = inlined_call_operand.hbm [shape: f32[16,128], index: 2, kind: output, shape index: {}]
  %s3 = sld [smem:[#allocation0]]
  $region281: #{tpu_custom_call.1} parent=0
    _
  %s5 = ssub.s32 1, %s3
  %s6 = scalar_select 0, %s5, %s3
  %8 = dma.hbm_to_smem %s0, 16, [#allocation4], [#allocation3]
  %9 = dma.done [#allocation3], 16
  %10 = sfence
  $region1: #{tpu_custom_call.1} parent=0
    #allocation5 [shape = 'u8[262144]{0}', space=vmem, size = 0x40000, scoped, tag = 'input window, operand 1, single buffered']
    #allocation6 [shape = 's32[2]{0}', space=sflag, size = 0x8, scoped, tag = 'scoped memory for tpu_custom_call.1']
    #allocation7 [shape = 's32[2]{0}', space=sflag, size = 0x8, scoped, tag = 'scoped memory for tpu_custom_call.1']
    #allocation8 [shape = 'u8[8192]{0}', space=vmem, size = 0x2000, scoped, tag = 'output window, operand 0']
    %11 = vsyncpa [#allocation6], 0
    %12 = vsyncpa [#allocation7], 0
    %s13 = scalar_lea.sflag [#allocation7], 1
    %14 = vsyncpa %s13, 0
    loop: start=0, step=1, limit=4
    $region2: #{tpu_custom_call.1} parent=1 // loop_pre_header
      _
    $region3: #{tpu_custom_call.1} parent=1 // loop_header
      %s16 = sphi 0, %s20
      %p17 = scmp.ge.s32.totalorder %s16, 4
      %s24 = sphi 0, %s24
      %s26 = sphi 0, %s24
      %s27 = sphi 0, %s26
      %s41 = sphi 0, %s27
      %s47 = sphi 0, %s49
      %s50 = sphi 0, %s47
      %s51 = sphi 0, %s50
      %s67 = sphi 0, %s51
    $region4: #{tpu_custom_call.1} parent=1 // loop_header_branch
      %19 = sbr.rel (%p17) target = $region8
    $region5: #{tpu_custom_call.1} parent=1 // loop_body
      %s21 = ssub.s32 %s16, 1
      %s22 = ssub.s32 %s16, 2
      %s23 = sadd.s32 %s16, 1
      %s25 = sadd.s32 %s24, 1
      %p28 = scmp.eq.s32.totalorder %s16, 1
      %p29 = scmp.ne.s32.totalorder %s24, %s26
      %p30 = scmp.eq.s32.totalorder %s16, 0
      %p31 = por %p29, %p30
      %p32 = scmp.ne.s32.totalorder %s24, %s26
      %p33 = scmp.eq.s32.totalorder %s21, 1
      %p34 = por %p32, %p33
      %p35 = scmp.ne.s32.totalorder %s26, %s27
      %p36 = scmp.eq.s32.totalorder %s21, 0
      %p37 = por %p35, %p36
      %p38 = scmp.ne.s32.totalorder %s26, %s27
      %p39 = scmp.eq.s32.totalorder %s22, 1
      %p40 = por %p38, %p39
      %p42 = scmp.ne.s32.totalorder %s27, %s41
      %p43 = scmp.eq.s32.totalorder %s22, 0
      %p44 = por %p42, %p43
      %s45 = ssub.s32 %s16, %s23
      %p46 = scmp.eq.s32.totalorder %s45, 0
      %s48 = sadd.s32 %s47, 1
      %s49 = scalar_select %p46, %s47, %s48
      %p52 = pneg %p46
      %p53 = scmp.eq.s32.totalorder %s16, 1
      %p54 = por %p52, %p53
      %p55 = scmp.ne.s32.totalorder %s47, %s50
      %p56 = scmp.eq.s32.totalorder %s16, 0
      %p57 = por %p55, %p56
      %p58 = scmp.ne.s32.totalorder %s47, %s50
      %p59 = scmp.eq.s32.totalorder %s21, 1
      %p60 = por %p58, %p59
      %p61 = scmp.ne.s32.totalorder %s50, %s51
      %p62 = scmp.eq.s32.totalorder %s21, 0
      %p63 = por %p61, %p62
      %p64 = scmp.ne.s32.totalorder %s50, %s51
      %p65 = scmp.eq.s32.totalorder %s22, 1
      %p66 = por %p64, %p65
      %p68 = scmp.ne.s32.totalorder %s51, %s67
      %p69 = scmp.eq.s32.totalorder %s22, 0
      %p70 = por %p68, %p69
      %p71 = scmp.le.s32.totalorder 1, %s16
      %p72 = scmp.lt.s32.totalorder %s16, 3
      %p73 = pnand %p71, %p72
      %p74 = pneg %p73
      // Predicated region
      $region9: #{tpu_custom_call.1} parent=5 // pred_check
        _
      $region10: #{tpu_custom_call.1} parent=5 // pred_check_branch
        %76 = sbr.rel (%p73) target = $region12
      $region11: #{tpu_custom_call.1} parent=5 // pred_region
        %s77 = ssub.s32 %s16, 1
        // Predicated region
        $region13: #{tpu_custom_call.1} parent=11 // pred_check
          %p78 = pneg %p37
        $region14: #{tpu_custom_call.1} parent=11 // pred_check_branch
          %80 = sbr.rel (%p78) target = $region16
        $region15: #{tpu_custom_call.1} parent=11 // pred_region
          %s82 = ssub.s32 8192, 8192
          %83 = vsyncadd [#allocation6], %s82
          %s84 = sshll.u32 [#allocation5], 4
          %s85 = int_to_ptr.vmem [resolvable:$true] %s84
          %90 = dma.hbm_to_vmem [thread:$0]  %s1, 8192, %s85, [#allocation6], 128, 128, 8
        $region16: #{tpu_custom_call.1} parent=11 // pred_fallthru
          _
      $region12: #{tpu_custom_call.1} parent=5 // pred_fallthru
        _
      %p91 = scmp.lt.s32.totalorder %s16, 2
      // Predicated region
      $region17: #{tpu_custom_call.1} parent=5 // pred_check
        %p92 = pneg %p91
      $region18: #{tpu_custom_call.1} parent=5 // pred_check_branch
        %94 = sbr.rel (%p92) target = $region20
      $region19: #{tpu_custom_call.1} parent=5 // pred_region
        _
      $region20: #{tpu_custom_call.1} parent=5 // pred_fallthru
        _
      %p95 = scmp.le.s32.totalorder 1, %s16
      %p96 = scmp.lt.s32.totalorder %s16, 3
      %p97 = pnand %p95, %p96
      %p98 = pneg %p97
      // Predicated region
      $region21: #{tpu_custom_call.1} parent=5 // pred_check
        _
      $region22: #{tpu_custom_call.1} parent=5 // pred_check_branch
        %100 = sbr.rel (%p97) target = $region24
      $region23: #{tpu_custom_call.1} parent=5 // pred_region
        %s101 = ssub.s32 %s16, 1
        // Predicated region
        $region25: #{tpu_custom_call.1} parent=23 // pred_check
          %p102 = pneg %p37
        $region26: #{tpu_custom_call.1} parent=23 // pred_check_branch
          %104 = sbr.rel (%p102) target = $region28
        $region27: #{tpu_custom_call.1} parent=23 // pred_region
          %105 = dma.done [#allocation6], 8192
        $region28: #{tpu_custom_call.1} parent=23 // pred_fallthru
          _
        %p106 = pneg %p37
        %p107 = pneg %p34
        %p108 = pneg %p63
        %p109 = pneg %p60
        %s110 = sand.u32 %s50, 1
        %s111 = scalar_lea.sflag [#allocation7], %s110
        %s112 = sand.u32 %s50, 1
        %s113 = smul.addr %s112, 8
        %s114 = scalar_lea.vmem [#allocation8], %s113
        %s115 = smul.u32 %s21, 8
        %s116 = sld [smem:[#allocation4 + %s115]]
        %p117 = scmp.gt.s32.totalorder %s116, 0
        %s118 = scalar_select %p117, %s116, 0
        %p119 = scmp.lt.s32.totalorder %s118, 511
        %s120 = scalar_select %p119, %s118, 511
        %s121 = scalar_lea.vmem [#allocation5], %s120
        %p123 = scmp.lt.u32.totalorder 1, 8
        %p124 = pneg %p123
        // Predicated region
        $region29: #{tpu_custom_call.1} parent=23 // pred_check
          _
        $region30: #{tpu_custom_call.1} parent=23 // pred_check_branch
          %126 = sbr.rel (%p123) target = $region32
        $region31: #{tpu_custom_call.1} parent=23 // pred_region
          %s142 = sand.u32 1, 7
          %p143 = scmp.eq.s32.totalorder %s142, 0
          %p144 = pneg %p143
          // Predicated region
          $region44: #{tpu_custom_call.1} parent=31 // pred_check
            _
          $region45: #{tpu_custom_call.1} parent=31 // pred_check_branch
            %146 = sbr.rel (%p143) target = $region47
          $region46: #{tpu_custom_call.1} parent=31 // pred_region
            %s147 = sand.u32 1, 7
            %s148 = ssub.s32 1, %s147
            %s149 = scalar_lea.vmem %s121, %s148 [#allocation5]
            %s150 = ssub.s32 1, %s147
            %s151 = scalar_lea.vmem %s114, %s150 [#allocation8]
            %s152 = sshll.u32 1, %s147
            %s153 = ssub.s32 %s152, 1
            loop: start=0, step=1, limit=1
            $region48: #{tpu_custom_call.1} parent=46 // loop_pre_header
              _
            $region49: #{tpu_custom_call.1} parent=46 // loop_header
              %s155 = sphi 0, %s159
              %p156 = scmp.ge.s32.totalorder %s155, 1
              %s160 = sphi %s149, %s149
              %s161 = sphi %s151, %s151
            $region50: #{tpu_custom_call.1} parent=46 // loop_header_branch
              %158 = sbr.rel (%p156) target = $region54
            $region51: #{tpu_custom_call.1} parent=46 // loop_body
              %v162 = vld [vmem:[%s160] sm:%s153]
              %163 = vst [vmem:[%s161] sm:%s153] %v162
            $region52: #{tpu_custom_call.1} parent=46 // loop_footer
              %s159 = sadd.s32 1, %s155
            $region53: #{tpu_custom_call.1} parent=46 // loop_footer_branch
              %154 = sbr.rel target = $region49
            $region54: #{tpu_custom_call.1} parent=46 // loop_exit
              _
          $region47: #{tpu_custom_call.1} parent=31 // pred_fallthru
            _
        $region32: #{tpu_custom_call.1} parent=23 // pred_fallthru
          _
        // Predicated region
        $region33: #{tpu_custom_call.1} parent=23 // pred_check
          %p127 = pneg %p123
        $region34: #{tpu_custom_call.1} parent=23 // pred_check_branch
          %129 = sbr.rel (%p127) target = $region36
        $region35: #{tpu_custom_call.1} parent=23 // pred_region
          %s130 = sshll.u32 1, 1
          %s131 = ssub.s32 %s130, 1
          loop: start=0, step=1, limit=1
          $region37: #{tpu_custom_call.1} parent=35 // loop_pre_header
            _
          $region38: #{tpu_custom_call.1} parent=35 // loop_header
            %s133 = sphi 0, %s137
            %p134 = scmp.ge.s32.totalorder %s133, 1
            %s138 = sphi %s121, %s121
            %s139 = sphi %s114, %s114
          $region39: #{tpu_custom_call.1} parent=35 // loop_header_branch
            %136 = sbr.rel (%p134) target = $region43
          $region40: #{tpu_custom_call.1} parent=35 // loop_body
            %v140 = vld [vmem:[%s138] sm:%s131]
            %141 = vst [vmem:[%s139] sm:%s131] %v140
          $region41: #{tpu_custom_call.1} parent=35 // loop_footer
            %s137 = sadd.s32 1, %s133
          $region42: #{tpu_custom_call.1} parent=35 // loop_footer_branch
            %132 = sbr.rel target = $region38
          $region43: #{tpu_custom_call.1} parent=35 // loop_exit
            _
        $region36: #{tpu_custom_call.1} parent=23 // pred_fallthru
          _
        // Predicated region
        $region55: #{tpu_custom_call.1} parent=23 // pred_check
          _
        $region56: #{tpu_custom_call.1} parent=23 // pred_check_branch
          %166 = sbr.rel (0) target = $region58
        $region57: #{tpu_custom_call.1} parent=23 // pred_region
          %167 = vsyncadd [#allocation2], 16
        $region58: #{tpu_custom_call.1} parent=23 // pred_fallthru
          _
        %s168 = sadd.s32 %s115, 1
        %s169 = sld [smem:[#allocation4 + %s168]]
        %p170 = scmp.gt.s32.totalorder %s169, 0
        %s171 = scalar_select %p170, %s169, 0
        %p172 = scmp.lt.s32.totalorder %s171, 511
        %s173 = scalar_select %p172, %s171, 511
        %s174 = scalar_lea.vmem [#allocation5], %s173
        %s175 = scalar_lea.vmem %s114, 1 [#allocation8]
        %p177 = scmp.lt.u32.totalorder 1, 8
        %p178 = pneg %p177
        // Predicated region
        $region59: #{tpu_custom_call.1} parent=23 // pred_check
          _
        $region60: #{tpu_custom_call.1} parent=23 // pred_check_branch
          %180 = sbr.rel (%p177) target = $region62
        $region61: #{tpu_custom_call.1} parent=23 // pred_region
          %s196 = sand.u32 1, 7
          %p197 = scmp.eq.s32.totalorder %s196, 0
          %p198 = pneg %p197
          // Predicated region
          $region74: #{tpu_custom_call.1} parent=61 // pred_check
            _
          $region75: #{tpu_custom_call.1} parent=61 // pred_check_branch
            %200 = sbr.rel (%p197) target = $region77
          $region76: #{tpu_custom_call.1} parent=61 // pred_region
            %s201 = sand.u32 1, 7
            %s202 = ssub.s32 1, %s201
            %s203 = scalar_lea.vmem %s174, %s202 [#allocation5]
            %s204 = ssub.s32 1, %s201
            %s205 = scalar_lea.vmem %s175, %s204 [#allocation8]
            %s206 = sshll.u32 1, %s201
            %s207 = ssub.s32 %s206, 1
            loop: start=0, step=1, limit=1
            $region78: #{tpu_custom_call.1} parent=76 // loop_pre_header
              _
            $region79: #{tpu_custom_call.1} parent=76 // loop_header
              %s209 = sphi 0, %s213
              %p210 = scmp.ge.s32.totalorder %s209, 1
              %s214 = sphi %s203, %s203
              %s215 = sphi %s205, %s205
            $region80: #{tpu_custom_call.1} parent=76 // loop_header_branch
              %212 = sbr.rel (%p210) target = $region84
            $region81: #{tpu_custom_call.1} parent=76 // loop_body
              %v216 = vld [vmem:[%s214] sm:%s207]
              %217 = vst [vmem:[%s215] sm:%s207] %v216
            $region82: #{tpu_custom_call.1} parent=76 // loop_footer
              %s213 = sadd.s32 1, %s209
            $region83: #{tpu_custom_call.1} parent=76 // loop_footer_branch
              %208 = sbr.rel target = $region79
            $region84: #{tpu_custom_call.1} parent=76 // loop_exit
              _
          $region77: #{tpu_custom_call.1} parent=61 // pred_fallthru
            _
        $region62: #{tpu_custom_call.1} parent=23 // pred_fallthru
          _
        // Predicated region
        $region63: #{tpu_custom_call.1} parent=23 // pred_check
          %p181 = pneg %p177
        $region64: #{tpu_custom_call.1} parent=23 // pred_check_branch
          %183 = sbr.rel (%p181) target = $region66
        $region65: #{tpu_custom_call.1} parent=23 // pred_region
          %s184 = sshll.u32 1, 1
          %s185 = ssub.s32 %s184, 1
          loop: start=0, step=1, limit=1
          $region67: #{tpu_custom_call.1} parent=65 // loop_pre_header
            _
          $region68: #{tpu_custom_call.1} parent=65 // loop_header
            %s187 = sphi 0, %s191
            %p188 = scmp.ge.s32.totalorder %s187, 1
            %s192 = sphi %s174, %s174
            %s193 = sphi %s175, %s175
          $region69: #{tpu_custom_call.1} parent=65 // loop_header_branch
            %190 = sbr.rel (%p188) target = $region73
          $region70: #{tpu_custom_call.1} parent=65 // loop_body
            %v194 = vld [vmem:[%s192] sm:%s185]
            %195 = vst [vmem:[%s193] sm:%s185] %v194
          $region71: #{tpu_custom_call.1} parent=65 // loop_footer
            %s191 = sadd.s32 1, %s187
          $region72: #{tpu_custom_call.1} parent=65 // loop_footer_branch
            %186 = sbr.rel target = $region68
          $region73: #{tpu_custom_call.1} parent=65 // loop_exit
            _
        $region66: #{tpu_custom_call.1} parent=23 // pred_fallthru
          _
        // Predicated region
        $region85: #{tpu_custom_call.1} parent=23 // pred_check
          _
        $region86: #{tpu_custom_call.1} parent=23 // pred_check_branch
          %220 = sbr.rel (0) target = $region88
        $region87: #{tpu_custom_call.1} parent=23 // pred_region
          %221 = vsyncadd [#allocation2], 16
        $region88: #{tpu_custom_call.1} parent=23 // pred_fallthru
          _
        %s222 = sadd.s32 %s115, 2
        %s223 = sld [smem:[#allocation4 + %s222]]
        %p224 = scmp.gt.s32.totalorder %s223, 0
        %s225 = scalar_select %p224, %s223, 0
        %p226 = scmp.lt.s32.totalorder %s225, 511
        %s227 = scalar_select %p226, %s225, 511
        %s228 = scalar_lea.vmem [#allocation5], %s227
        %s229 = scalar_lea.vmem %s114, 2 [#allocation8]
        %p231 = scmp.lt.u32.totalorder 1, 8
        %p232 = pneg %p231
        // Predicated region
        $region89: #{tpu_custom_call.1} parent=23 // pred_check
          _
        $region90: #{tpu_custom_call.1} parent=23 // pred_check_branch
          %234 = sbr.rel (%p231) target = $region92
        $region91: #{tpu_custom_call.1} parent=23 // pred_region
          %s250 = sand.u32 1, 7
          %p251 = scmp.eq.s32.totalorder %s250, 0
          %p252 = pneg %p251
          // Predicated region
          $region104: #{tpu_custom_call.1} parent=91 // pred_check
            _
          $region105: #{tpu_custom_call.1} parent=91 // pred_check_branch
            %254 = sbr.rel (%p251) target = $region107
          $region106: #{tpu_custom_call.1} parent=91 // pred_region
            %s255 = sand.u32 1, 7
            %s256 = ssub.s32 1, %s255
            %s257 = scalar_lea.vmem %s228, %s256 [#allocation5]
            %s258 = ssub.s32 1, %s255
            %s259 = scalar_lea.vmem %s229, %s258 [#allocation8]
            %s260 = sshll.u32 1, %s255
            %s261 = ssub.s32 %s260, 1
            loop: start=0, step=1, limit=1
            $region108: #{tpu_custom_call.1} parent=106 // loop_pre_header
              _
            $region109: #{tpu_custom_call.1} parent=106 // loop_header
              %s263 = sphi 0, %s267
              %p264 = scmp.ge.s32.totalorder %s263, 1
              %s268 = sphi %s257, %s257
              %s269 = sphi %s259, %s259
            $region110: #{tpu_custom_call.1} parent=106 // loop_header_branch
              %266 = sbr.rel (%p264) target = $region114
            $region111: #{tpu_custom_call.1} parent=106 // loop_body
              %v270 = vld [vmem:[%s268] sm:%s261]
              %271 = vst [vmem:[%s269] sm:%s261] %v270
            $region112: #{tpu_custom_call.1} parent=106 // loop_footer
              %s267 = sadd.s32 1, %s263
            $region113: #{tpu_custom_call.1} parent=106 // loop_footer_branch
              %262 = sbr.rel target = $region109
            $region114: #{tpu_custom_call.1} parent=106 // loop_exit
              _
          $region107: #{tpu_custom_call.1} parent=91 // pred_fallthru
            _
        $region92: #{tpu_custom_call.1} parent=23 // pred_fallthru
          _
        // Predicated region
        $region93: #{tpu_custom_call.1} parent=23 // pred_check
          %p235 = pneg %p231
        $region94: #{tpu_custom_call.1} parent=23 // pred_check_branch
          %237 = sbr.rel (%p235) target = $region96
        $region95: #{tpu_custom_call.1} parent=23 // pred_region
          %s238 = sshll.u32 1, 1
          %s239 = ssub.s32 %s238, 1
          loop: start=0, step=1, limit=1
          $region97: #{tpu_custom_call.1} parent=95 // loop_pre_header
            _
          $region98: #{tpu_custom_call.1} parent=95 // loop_header
            %s241 = sphi 0, %s245
            %p242 = scmp.ge.s32.totalorder %s241, 1
            %s246 = sphi %s228, %s228
            %s247 = sphi %s229, %s229
          $region99: #{tpu_custom_call.1} parent=95 // loop_header_branch
            %244 = sbr.rel (%p242) target = $region103
          $region100: #{tpu_custom_call.1} parent=95 // loop_body
            %v248 = vld [vmem:[%s246] sm:%s239]
            %249 = vst [vmem:[%s247] sm:%s239] %v248
          $region101: #{tpu_custom_call.1} parent=95 // loop_footer
            %s245 = sadd.s32 1, %s241
          $region102: #{tpu_custom_call.1} parent=95 // loop_footer_branch
            %240 = sbr.rel target = $region98
          $region103: #{tpu_custom_call.1} parent=95 // loop_exit
            _
        $region96: #{tpu_custom_call.1} parent=23 // pred_fallthru
          _
        // Predicated region
        $region115: #{tpu_custom_call.1} parent=23 // pred_check
          _
        $region116: #{tpu_custom_call.1} parent=23 // pred_check_branch
          %274 = sbr.rel (0) target = $region118
        $region117: #{tpu_custom_call.1} parent=23 // pred_region
          %275 = vsyncadd [#allocation2], 16
        $region118: #{tpu_custom_call.1} parent=23 // pred_fallthru
          _
        %s276 = sadd.s32 %s115, 3
        %s277 = sld [smem:[#allocation4 + %s276]]
        %p278 = scmp.gt.s32.totalorder %s277, 0
        %s279 = scalar_select %p278, %s277, 0
        %p280 = scmp.lt.s32.totalorder %s279, 511
        %s281 = scalar_select %p280, %s279, 511
        %s282 = scalar_lea.vmem [#allocation5], %s281
        %s283 = scalar_lea.vmem %s114, 3 [#allocation8]
        %p285 = scmp.lt.u32.totalorder 1, 8
        %p286 = pneg %p285
        // Predicated region
        $region119: #{tpu_custom_call.1} parent=23 // pred_check
          _
        $region120: #{tpu_custom_call.1} parent=23 // pred_check_branch
          %288 = sbr.rel (%p285) target = $region122
        $region121: #{tpu_custom_call.1} parent=23 // pred_region
          %s304 = sand.u32 1, 7
          %p305 = scmp.eq.s32.totalorder %s304, 0
          %p306 = pneg %p305
          // Predicated region
          $region134: #{tpu_custom_call.1} parent=121 // pred_check
            _
          $region135: #{tpu_custom_call.1} parent=121 // pred_check_branch
            %308 = sbr.rel (%p305) target = $region137
          $region136: #{tpu_custom_call.1} parent=121 // pred_region
            %s309 = sand.u32 1, 7
            %s310 = ssub.s32 1, %s309
            %s311 = scalar_lea.vmem %s282, %s310 [#allocation5]
            %s312 = ssub.s32 1, %s309
            %s313 = scalar_lea.vmem %s283, %s312 [#allocation8]
            %s314 = sshll.u32 1, %s309
            %s315 = ssub.s32 %s314, 1
            loop: start=0, step=1, limit=1
            $region138: #{tpu_custom_call.1} parent=136 // loop_pre_header
              _
            $region139: #{tpu_custom_call.1} parent=136 // loop_header
              %s317 = sphi 0, %s321
              %p318 = scmp.ge.s32.totalorder %s317, 1
              %s322 = sphi %s311, %s311
              %s323 = sphi %s313, %s313
            $region140: #{tpu_custom_call.1} parent=136 // loop_header_branch
              %320 = sbr.rel (%p318) target = $region144
            $region141: #{tpu_custom_call.1} parent=136 // loop_body
              %v324 = vld [vmem:[%s322] sm:%s315]
              %325 = vst [vmem:[%s323] sm:%s315] %v324
            $region142: #{tpu_custom_call.1} parent=136 // loop_footer
              %s321 = sadd.s32 1, %s317
            $region143: #{tpu_custom_call.1} parent=136 // loop_footer_branch
              %316 = sbr.rel target = $region139
            $region144: #{tpu_custom_call.1} parent=136 // loop_exit
              _
          $region137: #{tpu_custom_call.1} parent=121 // pred_fallthru
            _
        $region122: #{tpu_custom_call.1} parent=23 // pred_fallthru
          _
        // Predicated region
        $region123: #{tpu_custom_call.1} parent=23 // pred_check
          %p289 = pneg %p285
        $region124: #{tpu_custom_call.1} parent=23 // pred_check_branch
          %291 = sbr.rel (%p289) target = $region126
        $region125: #{tpu_custom_call.1} parent=23 // pred_region
          %s292 = sshll.u32 1, 1
          %s293 = ssub.s32 %s292, 1
          loop: start=0, step=1, limit=1
          $region127: #{tpu_custom_call.1} parent=125 // loop_pre_header
            _
          $region128: #{tpu_custom_call.1} parent=125 // loop_header
            %s295 = sphi 0, %s299
            %p296 = scmp.ge.s32.totalorder %s295, 1
            %s300 = sphi %s282, %s282
            %s301 = sphi %s283, %s283
          $region129: #{tpu_custom_call.1} parent=125 // loop_header_branch
            %298 = sbr.rel (%p296) target = $region133
          $region130: #{tpu_custom_call.1} parent=125 // loop_body
            %v302 = vld [vmem:[%s300] sm:%s293]
            %303 = vst [vmem:[%s301] sm:%s293] %v302
          $region131: #{tpu_custom_call.1} parent=125 // loop_footer
            %s299 = sadd.s32 1, %s295
          $region132: #{tpu_custom_call.1} parent=125 // loop_footer_branch
            %294 = sbr.rel target = $region128
          $region133: #{tpu_custom_call.1} parent=125 // loop_exit
            _
        $region126: #{tpu_custom_call.1} parent=23 // pred_fallthru
          _
        // Predicated region
        $region145: #{tpu_custom_call.1} parent=23 // pred_check
          _
        $region146: #{tpu_custom_call.1} parent=23 // pred_check_branch
          %328 = sbr.rel (0) target = $region148
        $region147: #{tpu_custom_call.1} parent=23 // pred_region
          %329 = vsyncadd [#allocation2], 16
        $region148: #{tpu_custom_call.1} parent=23 // pred_fallthru
          _
        %s330 = sadd.s32 %s115, 4
        %s331 = sld [smem:[#allocation4 + %s330]]
        %p332 = scmp.gt.s32.totalorder %s331, 0
        %s333 = scalar_select %p332, %s331, 0
        %p334 = scmp.lt.s32.totalorder %s333, 511
        %s335 = scalar_select %p334, %s333, 511
        %s336 = scalar_lea.vmem [#allocation5], %s335
        %s337 = scalar_lea.vmem %s114, 4 [#allocation8]
        %p339 = scmp.lt.u32.totalorder 1, 8
        %p340 = pneg %p339
        // Predicated region
        $region149: #{tpu_custom_call.1} parent=23 // pred_check
          _
        $region150: #{tpu_custom_call.1} parent=23 // pred_check_branch
          %342 = sbr.rel (%p339) target = $region152
        $region151: #{tpu_custom_call.1} parent=23 // pred_region
          %s358 = sand.u32 1, 7
          %p359 = scmp.eq.s32.totalorder %s358, 0
          %p360 = pneg %p359
          // Predicated region
          $region164: #{tpu_custom_call.1} parent=151 // pred_check
            _
          $region165: #{tpu_custom_call.1} parent=151 // pred_check_branch
            %362 = sbr.rel (%p359) target = $region167
          $region166: #{tpu_custom_call.1} parent=151 // pred_region
            %s363 = sand.u32 1, 7
            %s364 = ssub.s32 1, %s363
            %s365 = scalar_lea.vmem %s336, %s364 [#allocation5]
            %s366 = ssub.s32 1, %s363
            %s367 = scalar_lea.vmem %s337, %s366 [#allocation8]
            %s368 = sshll.u32 1, %s363
            %s369 = ssub.s32 %s368, 1
            loop: start=0, step=1, limit=1
            $region168: #{tpu_custom_call.1} parent=166 // loop_pre_header
              _
            $region169: #{tpu_custom_call.1} parent=166 // loop_header
              %s371 = sphi 0, %s375
              %p372 = scmp.ge.s32.totalorder %s371, 1
              %s376 = sphi %s365, %s365
              %s377 = sphi %s367, %s367
            $region170: #{tpu_custom_call.1} parent=166 // loop_header_branch
              %374 = sbr.rel (%p372) target = $region174
            $region171: #{tpu_custom_call.1} parent=166 // loop_body
              %v378 = vld [vmem:[%s376] sm:%s369]
              %379 = vst [vmem:[%s377] sm:%s369] %v378
            $region172: #{tpu_custom_call.1} parent=166 // loop_footer
              %s375 = sadd.s32 1, %s371
            $region173: #{tpu_custom_call.1} parent=166 // loop_footer_branch
              %370 = sbr.rel target = $region169
            $region174: #{tpu_custom_call.1} parent=166 // loop_exit
              _
          $region167: #{tpu_custom_call.1} parent=151 // pred_fallthru
            _
        $region152: #{tpu_custom_call.1} parent=23 // pred_fallthru
          _
        // Predicated region
        $region153: #{tpu_custom_call.1} parent=23 // pred_check
          %p343 = pneg %p339
        $region154: #{tpu_custom_call.1} parent=23 // pred_check_branch
          %345 = sbr.rel (%p343) target = $region156
        $region155: #{tpu_custom_call.1} parent=23 // pred_region
          %s346 = sshll.u32 1, 1
          %s347 = ssub.s32 %s346, 1
          loop: start=0, step=1, limit=1
          $region157: #{tpu_custom_call.1} parent=155 // loop_pre_header
            _
          $region158: #{tpu_custom_call.1} parent=155 // loop_header
            %s349 = sphi 0, %s353
            %p350 = scmp.ge.s32.totalorder %s349, 1
            %s354 = sphi %s336, %s336
            %s355 = sphi %s337, %s337
          $region159: #{tpu_custom_call.1} parent=155 // loop_header_branch
            %352 = sbr.rel (%p350) target = $region163
          $region160: #{tpu_custom_call.1} parent=155 // loop_body
            %v356 = vld [vmem:[%s354] sm:%s347]
            %357 = vst [vmem:[%s355] sm:%s347] %v356
          $region161: #{tpu_custom_call.1} parent=155 // loop_footer
            %s353 = sadd.s32 1, %s349
          $region162: #{tpu_custom_call.1} parent=155 // loop_footer_branch
            %348 = sbr.rel target = $region158
          $region163: #{tpu_custom_call.1} parent=155 // loop_exit
            _
        $region156: #{tpu_custom_call.1} parent=23 // pred_fallthru
          _
        // Predicated region
        $region175: #{tpu_custom_call.1} parent=23 // pred_check
          _
        $region176: #{tpu_custom_call.1} parent=23 // pred_check_branch
          %382 = sbr.rel (0) target = $region178
        $region177: #{tpu_custom_call.1} parent=23 // pred_region
          %383 = vsyncadd [#allocation2], 16
        $region178: #{tpu_custom_call.1} parent=23 // pred_fallthru
          _
        %s384 = sadd.s32 %s115, 5
        %s385 = sld [smem:[#allocation4 + %s384]]
        %p386 = scmp.gt.s32.totalorder %s385, 0
        %s387 = scalar_select %p386, %s385, 0
        %p388 = scmp.lt.s32.totalorder %s387, 511
        %s389 = scalar_select %p388, %s387, 511
        %s390 = scalar_lea.vmem [#allocation5], %s389
        %s391 = scalar_lea.vmem %s114, 5 [#allocation8]
        %p393 = scmp.lt.u32.totalorder 1, 8
        %p394 = pneg %p393
        // Predicated region
        $region179: #{tpu_custom_call.1} parent=23 // pred_check
          _
        $region180: #{tpu_custom_call.1} parent=23 // pred_check_branch
          %396 = sbr.rel (%p393) target = $region182
        $region181: #{tpu_custom_call.1} parent=23 // pred_region
          %s412 = sand.u32 1, 7
          %p413 = scmp.eq.s32.totalorder %s412, 0
          %p414 = pneg %p413
          // Predicated region
          $region194: #{tpu_custom_call.1} parent=181 // pred_check
            _
          $region195: #{tpu_custom_call.1} parent=181 // pred_check_branch
            %416 = sbr.rel (%p413) target = $region197
          $region196: #{tpu_custom_call.1} parent=181 // pred_region
            %s417 = sand.u32 1, 7
            %s418 = ssub.s32 1, %s417
            %s419 = scalar_lea.vmem %s390, %s418 [#allocation5]
            %s420 = ssub.s32 1, %s417
            %s421 = scalar_lea.vmem %s391, %s420 [#allocation8]
            %s422 = sshll.u32 1, %s417
            %s423 = ssub.s32 %s422, 1
            loop: start=0, step=1, limit=1
            $region198: #{tpu_custom_call.1} parent=196 // loop_pre_header
              _
            $region199: #{tpu_custom_call.1} parent=196 // loop_header
              %s425 = sphi 0, %s429
              %p426 = scmp.ge.s32.totalorder %s425, 1
              %s430 = sphi %s419, %s419
              %s431 = sphi %s421, %s421
            $region200: #{tpu_custom_call.1} parent=196 // loop_header_branch
              %428 = sbr.rel (%p426) target = $region204
            $region201: #{tpu_custom_call.1} parent=196 // loop_body
              %v432 = vld [vmem:[%s430] sm:%s423]
              %433 = vst [vmem:[%s431] sm:%s423] %v432
            $region202: #{tpu_custom_call.1} parent=196 // loop_footer
              %s429 = sadd.s32 1, %s425
            $region203: #{tpu_custom_call.1} parent=196 // loop_footer_branch
              %424 = sbr.rel target = $region199
            $region204: #{tpu_custom_call.1} parent=196 // loop_exit
              _
          $region197: #{tpu_custom_call.1} parent=181 // pred_fallthru
            _
        $region182: #{tpu_custom_call.1} parent=23 // pred_fallthru
          _
        // Predicated region
        $region183: #{tpu_custom_call.1} parent=23 // pred_check
          %p397 = pneg %p393
        $region184: #{tpu_custom_call.1} parent=23 // pred_check_branch
          %399 = sbr.rel (%p397) target = $region186
        $region185: #{tpu_custom_call.1} parent=23 // pred_region
          %s400 = sshll.u32 1, 1
          %s401 = ssub.s32 %s400, 1
          loop: start=0, step=1, limit=1
          $region187: #{tpu_custom_call.1} parent=185 // loop_pre_header
            _
          $region188: #{tpu_custom_call.1} parent=185 // loop_header
            %s403 = sphi 0, %s407
            %p404 = scmp.ge.s32.totalorder %s403, 1
            %s408 = sphi %s390, %s390
            %s409 = sphi %s391, %s391
          $region189: #{tpu_custom_call.1} parent=185 // loop_header_branch
            %406 = sbr.rel (%p404) target = $region193
          $region190: #{tpu_custom_call.1} parent=185 // loop_body
            %v410 = vld [vmem:[%s408] sm:%s401]
            %411 = vst [vmem:[%s409] sm:%s401] %v410
          $region191: #{tpu_custom_call.1} parent=185 // loop_footer
            %s407 = sadd.s32 1, %s403
          $region192: #{tpu_custom_call.1} parent=185 // loop_footer_branch
            %402 = sbr.rel target = $region188
          $region193: #{tpu_custom_call.1} parent=185 // loop_exit
            _
        $region186: #{tpu_custom_call.1} parent=23 // pred_fallthru
          _
        // Predicated region
        $region205: #{tpu_custom_call.1} parent=23 // pred_check
          _
        $region206: #{tpu_custom_call.1} parent=23 // pred_check_branch
          %436 = sbr.rel (0) target = $region208
        $region207: #{tpu_custom_call.1} parent=23 // pred_region
          %437 = vsyncadd [#allocation2], 16
        $region208: #{tpu_custom_call.1} parent=23 // pred_fallthru
          _
        %s438 = sadd.s32 %s115, 6
        %s439 = sld [smem:[#allocation4 + %s438]]
        %p440 = scmp.gt.s32.totalorder %s439, 0
        %s441 = scalar_select %p440, %s439, 0
        %p442 = scmp.lt.s32.totalorder %s441, 511
        %s443 = scalar_select %p442, %s441, 511
        %s444 = scalar_lea.vmem [#allocation5], %s443
        %s445 = scalar_lea.vmem %s114, 6 [#allocation8]
        %p447 = scmp.lt.u32.totalorder 1, 8
        %p448 = pneg %p447
        // Predicated region
        $region209: #{tpu_custom_call.1} parent=23 // pred_check
          _
        $region210: #{tpu_custom_call.1} parent=23 // pred_check_branch
          %450 = sbr.rel (%p447) target = $region212
        $region211: #{tpu_custom_call.1} parent=23 // pred_region
          %s466 = sand.u32 1, 7
          %p467 = scmp.eq.s32.totalorder %s466, 0
          %p468 = pneg %p467
          // Predicated region
          $region224: #{tpu_custom_call.1} parent=211 // pred_check
            _
          $region225: #{tpu_custom_call.1} parent=211 // pred_check_branch
            %470 = sbr.rel (%p467) target = $region227
          $region226: #{tpu_custom_call.1} parent=211 // pred_region
            %s471 = sand.u32 1, 7
            %s472 = ssub.s32 1, %s471
            %s473 = scalar_lea.vmem %s444, %s472 [#allocation5]
            %s474 = ssub.s32 1, %s471
            %s475 = scalar_lea.vmem %s445, %s474 [#allocation8]
            %s476 = sshll.u32 1, %s471
            %s477 = ssub.s32 %s476, 1
            loop: start=0, step=1, limit=1
            $region228: #{tpu_custom_call.1} parent=226 // loop_pre_header
              _
            $region229: #{tpu_custom_call.1} parent=226 // loop_header
              %s479 = sphi 0, %s483
              %p480 = scmp.ge.s32.totalorder %s479, 1
              %s484 = sphi %s473, %s473
              %s485 = sphi %s475, %s475
            $region230: #{tpu_custom_call.1} parent=226 // loop_header_branch
              %482 = sbr.rel (%p480) target = $region234
            $region231: #{tpu_custom_call.1} parent=226 // loop_body
              %v486 = vld [vmem:[%s484] sm:%s477]
              %487 = vst [vmem:[%s485] sm:%s477] %v486
            $region232: #{tpu_custom_call.1} parent=226 // loop_footer
              %s483 = sadd.s32 1, %s479
            $region233: #{tpu_custom_call.1} parent=226 // loop_footer_branch
              %478 = sbr.rel target = $region229
            $region234: #{tpu_custom_call.1} parent=226 // loop_exit
              _
          $region227: #{tpu_custom_call.1} parent=211 // pred_fallthru
            _
        $region212: #{tpu_custom_call.1} parent=23 // pred_fallthru
          _
        // Predicated region
        $region213: #{tpu_custom_call.1} parent=23 // pred_check
          %p451 = pneg %p447
        $region214: #{tpu_custom_call.1} parent=23 // pred_check_branch
          %453 = sbr.rel (%p451) target = $region216
        $region215: #{tpu_custom_call.1} parent=23 // pred_region
          %s454 = sshll.u32 1, 1
          %s455 = ssub.s32 %s454, 1
          loop: start=0, step=1, limit=1
          $region217: #{tpu_custom_call.1} parent=215 // loop_pre_header
            _
          $region218: #{tpu_custom_call.1} parent=215 // loop_header
            %s457 = sphi 0, %s461
            %p458 = scmp.ge.s32.totalorder %s457, 1
            %s462 = sphi %s444, %s444
            %s463 = sphi %s445, %s445
          $region219: #{tpu_custom_call.1} parent=215 // loop_header_branch
            %460 = sbr.rel (%p458) target = $region223
          $region220: #{tpu_custom_call.1} parent=215 // loop_body
            %v464 = vld [vmem:[%s462] sm:%s455]
            %465 = vst [vmem:[%s463] sm:%s455] %v464
          $region221: #{tpu_custom_call.1} parent=215 // loop_footer
            %s461 = sadd.s32 1, %s457
          $region222: #{tpu_custom_call.1} parent=215 // loop_footer_branch
            %456 = sbr.rel target = $region218
          $region223: #{tpu_custom_call.1} parent=215 // loop_exit
            _
        $region216: #{tpu_custom_call.1} parent=23 // pred_fallthru
          _
        // Predicated region
        $region235: #{tpu_custom_call.1} parent=23 // pred_check
          _
        $region236: #{tpu_custom_call.1} parent=23 // pred_check_branch
          %490 = sbr.rel (0) target = $region238
        $region237: #{tpu_custom_call.1} parent=23 // pred_region
          %491 = vsyncadd [#allocation2], 16
        $region238: #{tpu_custom_call.1} parent=23 // pred_fallthru
          _
        %s492 = sadd.s32 %s115, 7
        %s493 = sld [smem:[#allocation4 + %s492]]
        %p494 = scmp.gt.s32.totalorder %s493, 0
        %s495 = scalar_select %p494, %s493, 0
        %p496 = scmp.lt.s32.totalorder %s495, 511
        %s497 = scalar_select %p496, %s495, 511
        %s498 = scalar_lea.vmem [#allocation5], %s497
        %s499 = scalar_lea.vmem %s114, 7 [#allocation8]
        %p501 = scmp.lt.u32.totalorder 1, 8
        %p502 = pneg %p501
        // Predicated region
        $region239: #{tpu_custom_call.1} parent=23 // pred_check
          _
        $region240: #{tpu_custom_call.1} parent=23 // pred_check_branch
          %504 = sbr.rel (%p501) target = $region242
        $region241: #{tpu_custom_call.1} parent=23 // pred_region
          %s520 = sand.u32 1, 7
          %p521 = scmp.eq.s32.totalorder %s520, 0
          %p522 = pneg %p521
          // Predicated region
          $region254: #{tpu_custom_call.1} parent=241 // pred_check
            _
          $region255: #{tpu_custom_call.1} parent=241 // pred_check_branch
            %524 = sbr.rel (%p521) target = $region257
          $region256: #{tpu_custom_call.1} parent=241 // pred_region
            %s525 = sand.u32 1, 7
            %s526 = ssub.s32 1, %s525
            %s527 = scalar_lea.vmem %s498, %s526 [#allocation5]
            %s528 = ssub.s32 1, %s525
            %s529 = scalar_lea.vmem %s499, %s528 [#allocation8]
            %s530 = sshll.u32 1, %s525
            %s531 = ssub.s32 %s530, 1
            loop: start=0, step=1, limit=1
            $region258: #{tpu_custom_call.1} parent=256 // loop_pre_header
              _
            $region259: #{tpu_custom_call.1} parent=256 // loop_header
              %s533 = sphi 0, %s537
              %p534 = scmp.ge.s32.totalorder %s533, 1
              %s538 = sphi %s527, %s527
              %s539 = sphi %s529, %s529
            $region260: #{tpu_custom_call.1} parent=256 // loop_header_branch
              %536 = sbr.rel (%p534) target = $region264
            $region261: #{tpu_custom_call.1} parent=256 // loop_body
              %v540 = vld [vmem:[%s538] sm:%s531]
              %541 = vst [vmem:[%s539] sm:%s531] %v540
            $region262: #{tpu_custom_call.1} parent=256 // loop_footer
              %s537 = sadd.s32 1, %s533
            $region263: #{tpu_custom_call.1} parent=256 // loop_footer_branch
              %532 = sbr.rel target = $region259
            $region264: #{tpu_custom_call.1} parent=256 // loop_exit
              _
          $region257: #{tpu_custom_call.1} parent=241 // pred_fallthru
            _
        $region242: #{tpu_custom_call.1} parent=23 // pred_fallthru
          _
        // Predicated region
        $region243: #{tpu_custom_call.1} parent=23 // pred_check
          %p505 = pneg %p501
        $region244: #{tpu_custom_call.1} parent=23 // pred_check_branch
          %507 = sbr.rel (%p505) target = $region246
        $region245: #{tpu_custom_call.1} parent=23 // pred_region
          %s508 = sshll.u32 1, 1
          %s509 = ssub.s32 %s508, 1
          loop: start=0, step=1, limit=1
          $region247: #{tpu_custom_call.1} parent=245 // loop_pre_header
            _
          $region248: #{tpu_custom_call.1} parent=245 // loop_header
            %s511 = sphi 0, %s515
            %p512 = scmp.ge.s32.totalorder %s511, 1
            %s516 = sphi %s498, %s498
            %s517 = sphi %s499, %s499
          $region249: #{tpu_custom_call.1} parent=245 // loop_header_branch
            %514 = sbr.rel (%p512) target = $region253
          $region250: #{tpu_custom_call.1} parent=245 // loop_body
            %v518 = vld [vmem:[%s516] sm:%s509]
            %519 = vst [vmem:[%s517] sm:%s509] %v518
          $region251: #{tpu_custom_call.1} parent=245 // loop_footer
            %s515 = sadd.s32 1, %s511
          $region252: #{tpu_custom_call.1} parent=245 // loop_footer_branch
            %510 = sbr.rel target = $region248
          $region253: #{tpu_custom_call.1} parent=245 // loop_exit
            _
        $region246: #{tpu_custom_call.1} parent=23 // pred_fallthru
          _
        // Predicated region
        $region265: #{tpu_custom_call.1} parent=23 // pred_check
          _
        $region266: #{tpu_custom_call.1} parent=23 // pred_check_branch
          %544 = sbr.rel (0) target = $region268
        $region267: #{tpu_custom_call.1} parent=23 // pred_region
          %545 = vsyncadd [#allocation2], 16
        $region268: #{tpu_custom_call.1} parent=23 // pred_fallthru
          _
        %s546 = smul.u32 8, 1
        %s547 = sshll.u32 %s546, 4
        %548 = dma.done [#allocation2], %s547
        %s549 = sand.u32 %s50, 1
        %s550 = scalar_lea.sflag [#allocation7], %s549
        %s551 = sand.u32 %s50, 1
        %s552 = smul.addr %s551, 8
        %s553 = scalar_lea.vmem [#allocation8], %s552
        // Predicated region
        $region269: #{tpu_custom_call.1} parent=23 // pred_check
          %p554 = pneg %p60
        $region270: #{tpu_custom_call.1} parent=23 // pred_check_branch
          %556 = sbr.rel (%p554) target = $region272
        $region271: #{tpu_custom_call.1} parent=23 // pred_region
          %s558 = ssub.s32 128, 128
          %559 = vsyncadd %s550, %s558
          %s560 = smul.addr %s21, 128
          %s561 = scalar_lea.hbm %s2, %s560
          %s563 = sshll.u32 %s553, 4
          %s564 = int_to_ptr.vmem [resolvable:$true] %s563
          %566 = dma.vmem_to_hbm [thread:$0]  %s564, 128, %s561, %s550
        $region272: #{tpu_custom_call.1} parent=23 // pred_fallthru
          _
      $region24: #{tpu_custom_call.1} parent=5 // pred_fallthru
        _
      %p567 = scmp.le.s32.totalorder 2, %s16
      // Predicated region
      $region273: #{tpu_custom_call.1} parent=5 // pred_check
        %p568 = pneg %p567
      $region274: #{tpu_custom_call.1} parent=5 // pred_check_branch
        %570 = sbr.rel (%p568) target = $region276
      $region275: #{tpu_custom_call.1} parent=5 // pred_region
        %s571 = ssub.s32 %s16, 2
        // Predicated region
        $region277: #{tpu_custom_call.1} parent=275 // pred_check
          %p572 = pneg %p66
        $region278: #{tpu_custom_call.1} parent=275 // pred_check_branch
          %574 = sbr.rel (%p572) target = $region280
        $region279: #{tpu_custom_call.1} parent=275 // pred_region
          %s575 = sand.u32 %s51, 1
          %s576 = scalar_lea.sflag [#allocation7], %s575
          %s577 = sand.u32 %s51, 1
          %s578 = smul.addr %s577, 8
          %s579 = scalar_lea.vmem [#allocation8], %s578
          %580 = dma.done %s576, 128
        $region280: #{tpu_custom_call.1} parent=275 // pred_fallthru
          _
      $region276: #{tpu_custom_call.1} parent=5 // pred_fallthru
        _
    $region6: #{tpu_custom_call.1} parent=1 // loop_footer
      %s20 = sadd.s32 1, %s16
    $region7: #{tpu_custom_call.1} parent=1 // loop_footer_branch
      %15 = sbr.rel target = $region3
    $region8: #{tpu_custom_call.1} parent=1 // loop_exit
      _
    %581 = vsyncpa [#allocation6], 1
    %s582 = scalar_lea.sflag [#allocation6], 1
    %583 = vsyncpa %s582, 1
    %584 = vsyncpa [#allocation7], 1
    %s585 = scalar_lea.sflag [#allocation7], 1
    %586 = vsyncpa %s585, 1
  %587 = vsyncmov [#allocation2]
  %s588 = vpop.sfrf %587
  %p589 = scmp.eq.s32.totalorder %s588, 0
  %p590 = pneg %p589
  %592 = shalt.err (%p590)

</llo_original>
